<compile_context>
chip_gen: v5e
topology: v5e:2x2
jax: 0.10.0
libtpu: 0.0.40
codegen_flags: <defaults>
</compile_context>

<pallas_src>
import functools
import math

import jax
import jax.numpy as jnp
from jax.experimental import pallas as pl
from jax.experimental.pallas import tpu as pltpu


def _sigmoid_via_tanh(x):
    # sigmoid(x) == 0.5 * (tanh(x / 2) + 1): single EUP op (exact identity).
    return 0.5 * (jnp.tanh(0.5 * x) + 1.0)


def _lstm_kernel(tmax_ref, lens_ref, x_ref, wih_ref, whh_ref, bias_ref,
                 out_ref, ht_ref, ct_ref, gx_sc, h_sc, c_sc):
    """Grid = (batch_tile, time_chunk); one step == Tc timesteps of one tile."""
    bt = pl.program_id(0)
    ci = pl.program_id(1)
    n_chunks = pl.num_programs(1)
    BT, H = h_sc.shape
    Tc = out_ref.shape[-1] // H
    t0 = ci * Tc

    # New batch tile -> reset the recurrent state.
    @pl.when(ci == 0)
    def _():
        h_sc[...] = jnp.zeros_like(h_sc)
        c_sc[...] = jnp.zeros_like(c_sc)

    alive = t0 < tmax_ref[bt]          # any sequence in this tile still running?

    @pl.when(alive)
    def _():
        # Fused input projection for the whole chunk: one MXU matmul
        # (bf16 operands, f32 accumulation), bias folded in.  Staged in VMEM
        # scratch so the unrolled time loop keeps only h/c + small temps live.
        gx_sc[...] = jnp.dot(x_ref[...], wih_ref[...],
                             preferred_element_type=jnp.float32) + bias_ref[...]

        lens = lens_ref[...]           # (BT, 1) int32
        w_hh = whh_ref[...]            # (H, 4H) f32 (accuracy: no bf16 in recurrence)
        h = h_sc[...]                  # (BT, H) f32
        c = c_sc[...]                  # (BT, H) f32

        for k in range(Tc):            # static unroll; all slices static
            gates = gx_sc[k * BT:(k + 1) * BT, :] + jnp.dot(
                h, w_hh, preferred_element_type=jnp.float32)     # (BT, 4H)

            # PyTorch gate order: i, f, g, o
            i_g = _sigmoid_via_tanh(gates[:, 0 * H:1 * H])
            f_g = _sigmoid_via_tanh(gates[:, 1 * H:2 * H])
            g_g = jnp.tanh(gates[:, 2 * H:3 * H])
            o_g = _sigmoid_via_tanh(gates[:, 3 * H:4 * H])

            c_new = f_g * c + i_g * g_g
            h_new = o_g * jnp.tanh(c_new)

            # packed-sequence semantics: only update states while t < length;
            # padded positions of `out` are zero.
            valid = (t0 + k) < lens                     # (BT, 1), broadcasts over H
            out_ref[:, k * H:(k + 1) * H] = (
                jnp.where(valid, h_new, 0.0).astype(out_ref.dtype))
            h = jnp.where(valid, h_new, h)
            c = jnp.where(valid, c_new, c)

        h_sc[...] = h
        c_sc[...] = c

    # Fully-dead chunk (all sequences in this tile already finished): the output
    # block must still be written -> zero it, skip all compute.
    @pl.when(jnp.logical_not(alive))
    def _():
        out_ref[...] = jnp.zeros_like(out_ref)

    # Final states (resident output blocks, written once per batch tile).
    @pl.when(ci == n_chunks - 1)
    def _():
        ht_ref[...] = h_sc[...].astype(ht_ref.dtype)
        ct_ref[...] = c_sc[...].astype(ct_ref.dtype)


def _round_up(a, b):
    return ((a + b - 1) // b) * b


def _time_chunk_granule(H, BT):
    # out block last dim (Tc*H) must be a multiple of 128 lanes (when T_pad has
    # several chunks); the bf16 x block's second-minor dim (Tc*BT) must be a
    # multiple of the 16-row bf16 sublane packing.
    lane = 128 // math.gcd(H, 128)
    sub = max(1, 16 // math.gcd(BT, 16))
    return lane * sub // math.gcd(lane, sub)          # lcm(lane, sub)


def _pick_time_chunk(T, D, H, BT, stream_budget_bytes=8 << 20):
    g = _time_chunk_granule(H, BT)
    per_t = 2 * BT * (2 * D + 4 * H)     # double-buffered bf16 x + f32 out per unit Tc
    tc = max(g, (stream_budget_bytes // max(per_t, 1)) // g * g)
    tc = min(tc, 32)                     # bound the static unroll length
    tc = max(g, tc // g * g)
    tc = min(tc, _round_up(T, g))        # do not over-pad short sequences
    return int(tc)


@functools.partial(jax.jit, static_argnames=("batch_tile", "time_chunk"))
def lstm_forward(x, x_len, w_ih, w_hh, b_ih, b_hh, *, batch_tile=8, time_chunk=None):
    """x: (B, T, D) float; x_len: (B,) int.
    Returns (out (B,T,H), (ht (1,B,H), ct (1,B,H)))."""
    B, T, D = x.shape
    H = w_hh.shape[1]
    BT = batch_tile
    assert BT % 8 == 0, "batch tile must be a multiple of the sublane granule"
    B_pad = _round_up(B, BT)
    nbt = B_pad // BT

    Tc = time_chunk if time_chunk is not None else _pick_time_chunk(T, D, H, BT)
    assert Tc % _time_chunk_granule(H, BT) == 0
    T_pad = _round_up(T, Tc)
    n_chunks = T_pad // Tc

    # ---- layout plumbing in the wrapper (cheap, fused by XLA) --------------
    # x: pad, cast to bf16, lay out per batch tile in (time, batch) order so a
    # (batch-tile, time-chunk) block is a contiguous (Tc*BT, D) slab.
    xp = jnp.zeros((B_pad, T_pad, D), jnp.bfloat16).at[:B, :T].set(x.astype(jnp.bfloat16))
    x_r = (xp.reshape(nbt, BT, T_pad, D)
             .transpose(0, 2, 1, 3)
             .reshape(nbt, T_pad * BT, D))

    lens = jnp.zeros((B_pad,), jnp.int32).at[:B].set(x_len.astype(jnp.int32))
    lens_col = lens.reshape(B_pad, 1)
    tile_max = jnp.max(lens.reshape(nbt, BT), axis=1).astype(jnp.int32)      # (nbt,)

    wih_t = jnp.transpose(w_ih, (1, 0)).astype(jnp.bfloat16)                 # (D, 4H)
    whh_t = jnp.transpose(w_hh, (1, 0)).astype(jnp.float32)                  # (H, 4H)
    bias = (b_ih + b_hh).astype(jnp.float32).reshape(1, 4 * H)

    # VMEM budget estimate -> compiler limit (streamed blocks double-buffered,
    # resident weights/states, staged gates scratch), with headroom.
    est = (2 * (Tc * BT * D * 2 + BT * Tc * H * 4 + BT * 4)                  # streamed
           + 2 * (D * 4 * H * 2 + H * 4 * H * 4 + 4 * H * 4 + 2 * BT * H * 4)  # resident
           + Tc * BT * 4 * H * 4 + 2 * BT * H * 4)                           # scratch
    vmem_limit = int(min(64 << 20, max(32 << 20, 2 * est)))

    out2d, ht, ct = pl.pallas_call(
        _lstm_kernel,
        out_shape=(
            jax.ShapeDtypeStruct((B_pad, T_pad * H), x.dtype),
            jax.ShapeDtypeStruct((B_pad, H), x.dtype),
            jax.ShapeDtypeStruct((B_pad, H), x.dtype),
        ),
        grid_spec=pltpu.PrefetchScalarGridSpec(
            num_scalar_prefetch=1,                       # per-tile max lengths (SMEM)
            grid=(nbt, n_chunks),                        # batch tiles x time chunks
            in_specs=[
                pl.BlockSpec((BT, 1), lambda bt, c, tm: (bt, 0)),                 # lengths
                pl.BlockSpec((None, Tc * BT, D), lambda bt, c, tm: (bt, c, 0)),   # x chunk
                pl.BlockSpec((D, 4 * H), lambda bt, c, tm: (0, 0)),               # W_ih^T
                pl.BlockSpec((H, 4 * H), lambda bt, c, tm: (0, 0)),               # W_hh^T
                pl.BlockSpec((1, 4 * H), lambda bt, c, tm: (0, 0)),               # bias
            ],
            out_specs=[
                pl.BlockSpec((BT, Tc * H), lambda bt, c, tm: (bt, c)),            # out (lane dense)
                pl.BlockSpec((BT, H), lambda bt, c, tm: (bt, 0)),                 # ht (resident)
                pl.BlockSpec((BT, H), lambda bt, c, tm: (bt, 0)),                 # ct (resident)
            ],
            scratch_shapes=[
                pltpu.VMEM((Tc * BT, 4 * H), jnp.float32),    # staged x-gates for the chunk
                pltpu.VMEM((BT, H), jnp.float32),             # h state
                pltpu.VMEM((BT, H), jnp.float32),             # c state
            ],
        ),
        compiler_params=pltpu.CompilerParams(
            dimension_semantics=("parallel", "arbitrary"),    # batch tiles ||, time serial
            vmem_limit_bytes=vmem_limit,
        ),
    )(tile_max, lens_col, x_r, wih_t, whh_t, bias)

    out = out2d.reshape(B_pad, T_pad, H)[:B, :T]
    return out, (ht[:B][None, ...], ct[:B][None, ...])


def _lstm_reference(x, x_len, w_ih, w_hh, b_ih, b_hh):
    """Pure-JAX f32 reference with the same packed-sequence semantics."""
    B, T, D = x.shape
    H = w_hh.shape[1]

    def step(carry, inputs):
        h, c = carry
        x_t, t = inputs
        gates = x_t @ w_ih.T + h @ w_hh.T + b_ih + b_hh
        i = jax.nn.sigmoid(gates[:, 0 * H:1 * H])
        f = jax.nn.sigmoid(gates[:, 1 * H:2 * H])
        g = jnp.tanh(gates[:, 2 * H:3 * H])
        o = jax.nn.sigmoid(gates[:, 3 * H:4 * H])
        c_new = f * c + i * g
        h_new = o * jnp.tanh(c_new)
        valid = (t < x_len)[:, None]
        return ((jnp.where(valid, h_new, h), jnp.where(valid, c_new, c)),
                jnp.where(valid, h_new, 0.0))

    init = (jnp.zeros((B, H), jnp.float32), jnp.zeros((B, H), jnp.float32))
    (h, c), outs = jax.lax.scan(
        step, init, (jnp.transpose(x, (1, 0, 2)), jnp.arange(T)))
    return jnp.transpose(outs, (1, 0, 2)), h, c


if __name__ == "__main__":
    # B=12 (pads to 16 -> 2 batch tiles, exercising the parallel axis),
    # T=10 (pads to 12 with time_chunk=4 -> 3 chunks, exercising residency,
    # partial masking and the fully-dead-chunk path for the short second tile).
    B, T, D, H = 12, 10, 16, 32

    key = jax.random.PRNGKey(0)
    k_x, k_wih, k_whh, k_bih, k_bhh = jax.random.split(key, 5)

    # PyTorch-style uniform(-1/sqrt(H), 1/sqrt(H)) parameters.
    bound = 1.0 / (H ** 0.5)
    w_ih = jax.random.uniform(k_wih, (4 * H, D), jnp.float32, -bound, bound)
    w_hh = jax.random.uniform(k_whh, (4 * H, H), jnp.float32, -bound, bound)
    b_ih = jax.random.uniform(k_bih, (4 * H,), jnp.float32, -bound, bound)
    b_hh = jax.random.uniform(k_bhh, (4 * H,), jnp.float32, -bound, bound)

    x = jax.random.normal(k_x, (B, T, D), jnp.float32)
    # variable lengths in original (unsorted) order; max(x_len) == T so the
    # pad_packed_sequence output width matches T.
    x_len = jnp.array([10, 7, 3, 5, 8, 2, 9, 6, 4, 1, 3, 2], dtype=jnp.int32)

    out, (ht, ct) = lstm_forward(x, x_len, w_ih, w_hh, b_ih, b_hh, time_chunk=4)
    jax.block_until_ready((out, ht, ct))

    assert out.shape == (B, T, H)
    assert ht.shape == (1, B, H) and ct.shape == (1, B, H)

    # correctness check against a pure-JAX f32 reference
    # (only the x-projection uses bf16 -> modest tolerance)
    out_r, ht_r, ct_r = _lstm_reference(x, x_len, w_ih, w_hh, b_ih, b_hh)
    assert float(jnp.max(jnp.abs(out - out_r))) < 5e-2
    assert float(jnp.max(jnp.abs(ht[0] - ht_r))) < 5e-2
    assert float(jnp.max(jnp.abs(ct[0] - ct_r))) < 5e-2

    print("KERNEL_OK")
</pallas_src>

<mosaic_0001>
module attributes {stable_mosaic.version = 11 : i64} {
  func.func @_lstm_kernel(%arg0: i32, %arg1: i32, %arg2: memref<2xi32, #tpu.memory_space<smem>>, %arg3: memref<8x1xi32, #tpu.memory_space<vmem>>, %arg4: memref<1x32x16xbf16, #tpu.memory_space<vmem>>, %arg5: memref<16x128xbf16, #tpu.memory_space<vmem>>, %arg6: memref<32x128xf32, #tpu.memory_space<vmem>>, %arg7: memref<1x128xf32, #tpu.memory_space<vmem>>, %arg8: memref<8x128xf32, #tpu.memory_space<vmem>>, %arg9: memref<8x32xf32, #tpu.memory_space<vmem>>, %arg10: memref<8x32xf32, #tpu.memory_space<vmem>>, %arg11: memref<32x128xf32, #tpu.memory_space<vmem>>, %arg12: memref<8x32xf32, #tpu.memory_space<vmem>>, %arg13: memref<8x32xf32, #tpu.memory_space<vmem>>) attributes {dimension_semantics = [#tpu.dimension_semantics<parallel>, #tpu.dimension_semantics<arbitrary>], iteration_bounds = array<i64: 2, 3>, scalar_prefetch = 1 : i64, scratch_operands = 3 : i64, tpu.core_type = #tpu.core_type<tc>, window_params = [{transform_indices = @transform_0, window_bounds = array<i64: 8, 1>}, {transform_indices = @transform_1, window_bounds = array<i64: 1, 32, 16>}, {pipeline_mode = #tpu.pipeline_mode<synchronous>, transform_indices = @transform_2, window_bounds = array<i64: 16, 128>}, {pipeline_mode = #tpu.pipeline_mode<synchronous>, transform_indices = @transform_3, window_bounds = array<i64: 32, 128>}, {pipeline_mode = #tpu.pipeline_mode<synchronous>, transform_indices = @transform_4, window_bounds = array<i64: 1, 128>}, {transform_indices = @transform_5, window_bounds = array<i64: 8, 128>}, {transform_indices = @transform_6, window_bounds = array<i64: 8, 32>}, {transform_indices = @transform_7, window_bounds = array<i64: 8, 32>}]} {
    %c4_i32 = arith.constant 4 : i32
    %0 = arith.muli %arg1, %c4_i32 : i32
    %c0_i32 = arith.constant 0 : i32
    %1 = arith.cmpi eq, %arg1, %c0_i32 : i32
    %2 = arith.extui %1 : i1 to i32
    %c0_i32_0 = arith.constant 0 : i32
    %3 = arith.cmpi ne, %2, %c0_i32_0 : i32
    scf.if %3 {
      %cst = arith.constant 0.000000e+00 : f32
      %15 = vector.broadcast %cst : f32 to vector<8x32xf32>
      %c0 = arith.constant 0 : index
      %c0_4 = arith.constant 0 : index
      %16 = vector.load %arg12[%c0, %c0_4] : memref<8x32xf32, #tpu.memory_space<vmem>>, vector<8x32xf32>
      tpu.vector_store %arg12[%c0, %c0_4], %15 {strides = array<i32>} : memref<8x32xf32, #tpu.memory_space<vmem>>, vector<8x32xf32>,
      %cst_5 = arith.constant 0.000000e+00 : f32
      %17 = vector.broadcast %cst_5 : f32 to vector<8x32xf32>
      %c0_6 = arith.constant 0 : index
      %c0_7 = arith.constant 0 : index
      %18 = vector.load %arg13[%c0_6, %c0_7] : memref<8x32xf32, #tpu.memory_space<vmem>>, vector<8x32xf32>
      tpu.vector_store %arg13[%c0_6, %c0_7], %17 {strides = array<i32>} : memref<8x32xf32, #tpu.memory_space<vmem>>, vector<8x32xf32>,
    } else {
    }
    %4 = arith.index_cast %arg0 : i32 to index
    %5 = memref.load %arg2[%4] : memref<2xi32, #tpu.memory_space<smem>>
    %6 = arith.cmpi slt, %0, %5 : i32
    %7 = arith.extui %6 : i1 to i32
    %c0_i32_1 = arith.constant 0 : i32
    %8 = arith.cmpi ne, %7, %c0_i32_1 : i32
    scf.if %8 {
      %c0 = arith.constant 0 : index
      %c0_4 = arith.constant 0 : index
      %c0_5 = arith.constant 0 : index
      %15 = vector.load %arg4[%c0, %c0_4, %c0_5] : memref<1x32x16xbf16, #tpu.memory_space<vmem>>, vector<1x32x16xbf16>
      %16 = vector.shape_cast %15 : vector<1x32x16xbf16> to vector<32x16xbf16>
      %c0_6 = arith.constant 0 : index
      %c0_7 = arith.constant 0 : index
      %17 = vector.load %arg5[%c0_6, %c0_7] : memref<16x128xbf16, #tpu.memory_space<vmem>>, vector<16x128xbf16>
      %cst = arith.constant dense<0.000000e+00> : vector<32x128xf32>
      %18 = tpu.matmul %16, %17, %cst {dimension_numbers = #tpu.dot_dimension_numbers<[1], [0], [0], [1], [0, 0, 1, 1], [], []>} : vector<32x16xbf16>, vector<16x128xbf16>, vector<32x128xf32> -> vector<32x128xf32>
      %c0_8 = arith.constant 0 : index
      %c0_9 = arith.constant 0 : index
      %19 = vector.load %arg7[%c0_8, %c0_9] : memref<1x128xf32, #tpu.memory_space<vmem>>, vector<1x128xf32>
      %20 = vector.broadcast %19 : vector<1x128xf32> to vector<32x128xf32>
      %21 = arith.addf %18, %20 : vector<32x128xf32>
      %c0_10 = arith.constant 0 : index
      %c0_11 = arith.constant 0 : index
      %22 = vector.load %arg11[%c0_10, %c0_11] : memref<32x128xf32, #tpu.memory_space<vmem>>, vector<32x128xf32>
      tpu.vector_store %arg11[%c0_10, %c0_11], %21 {strides = array<i32>} : memref<32x128xf32, #tpu.memory_space<vmem>>, vector<32x128xf32>,
      %c0_12 = arith.constant 0 : index
      %c0_13 = arith.constant 0 : index
      %23 = vector.load %arg3[%c0_12, %c0_13] : memref<8x1xi32, #tpu.memory_space<vmem>>, vector<8x1xi32>
      %c0_14 = arith.constant 0 : index
      %c0_15 = arith.constant 0 : index
      %24 = vector.load %arg6[%c0_14, %c0_15] : memref<32x128xf32, #tpu.memory_space<vmem>>, vector<32x128xf32>
      %c0_16 = arith.constant 0 : index
      %c0_17 = arith.constant 0 : index
      %25 = vector.load %arg12[%c0_16, %c0_17] : memref<8x32xf32, #tpu.memory_space<vmem>>, vector<8x32xf32>
      %c0_18 = arith.constant 0 : index
      %c0_19 = arith.constant 0 : index
      %26 = vector.load %arg13[%c0_18, %c0_19] : memref<8x32xf32, #tpu.memory_space<vmem>>, vector<8x32xf32>
      %c0_20 = arith.constant 0 : index
      %c0_21 = arith.constant 0 : index
      %27 = vector.load %arg11[%c0_20, %c0_21] : memref<32x128xf32, #tpu.memory_space<vmem>>, vector<8x128xf32>
      %cst_22 = arith.constant dense<0.000000e+00> : vector<8x128xf32>
      %28 = tpu.matmul %25, %24, %cst_22 {dimension_numbers = #tpu.dot_dimension_numbers<[1], [0], [0], [1], [0, 0, 1, 1], [], []>} : vector<8x32xf32>, vector<32x128xf32>, vector<8x128xf32> -> vector<8x128xf32>
      %29 = arith.addf %27, %28 : vector<8x128xf32>
      %30 = vector.extract_strided_slice %29 {offsets = [0, 0], sizes = [8, 32], strides = [1, 1]} : vector<8x128xf32> to vector<8x32xf32>
      %cst_23 = arith.constant 5.000000e-01 : f32
      %31 = vector.broadcast %cst_23 : f32 to vector<8x32xf32>
      %32 = arith.mulf %31, %30 : vector<8x32xf32>
      %33 = math.tanh %32 : vector<8x32xf32>
      %cst_24 = arith.constant 1.000000e+00 : f32
      %34 = vector.broadcast %cst_24 : f32 to vector<8x32xf32>
      %35 = arith.addf %33, %34 : vector<8x32xf32>
      %cst_25 = arith.constant 5.000000e-01 : f32
      %36 = vector.broadcast %cst_25 : f32 to vector<8x32xf32>
      %37 = arith.mulf %36, %35 : vector<8x32xf32>
      %38 = vector.extract_strided_slice %29 {offsets = [0, 32], sizes = [8, 32], strides = [1, 1]} : vector<8x128xf32> to vector<8x32xf32>
      %cst_26 = arith.constant 5.000000e-01 : f32
      %39 = vector.broadcast %cst_26 : f32 to vector<8x32xf32>
      %40 = arith.mulf %39, %38 : vector<8x32xf32>
      %41 = math.tanh %40 : vector<8x32xf32>
      %cst_27 = arith.constant 1.000000e+00 : f32
      %42 = vector.broadcast %cst_27 : f32 to vector<8x32xf32>
      %43 = arith.addf %41, %42 : vector<8x32xf32>
      %cst_28 = arith.constant 5.000000e-01 : f32
      %44 = vector.broadcast %cst_28 : f32 to vector<8x32xf32>
      %45 = arith.mulf %44, %43 : vector<8x32xf32>
      %46 = vector.extract_strided_slice %29 {offsets = [0, 64], sizes = [8, 32], strides = [1, 1]} : vector<8x128xf32> to vector<8x32xf32>
      %47 = math.tanh %46 : vector<8x32xf32>
      %48 = vector.extract_strided_slice %29 {offsets = [0, 96], sizes = [8, 32], strides = [1, 1]} : vector<8x128xf32> to vector<8x32xf32>
      %cst_29 = arith.constant 5.000000e-01 : f32
      %49 = vector.broadcast %cst_29 : f32 to vector<8x32xf32>
      %50 = arith.mulf %49, %48 : vector<8x32xf32>
      %51 = math.tanh %50 : vector<8x32xf32>
      %cst_30 = arith.constant 1.000000e+00 : f32
      %52 = vector.broadcast %cst_30 : f32 to vector<8x32xf32>
      %53 = arith.addf %51, %52 : vector<8x32xf32>
      %cst_31 = arith.constant 5.000000e-01 : f32
      %54 = vector.broadcast %cst_31 : f32 to vector<8x32xf32>
      %55 = arith.mulf %54, %53 : vector<8x32xf32>
      %56 = arith.mulf %45, %26 : vector<8x32xf32>
      %57 = arith.mulf %37, %47 : vector<8x32xf32>
      %58 = arith.addf %56, %57 : vector<8x32xf32>
      %59 = math.tanh %58 : vector<8x32xf32>
      %60 = arith.mulf %55, %59 : vector<8x32xf32>
      %c0_i32_32 = arith.constant 0 : i32
      %61 = arith.addi %0, %c0_i32_32 : i32
      %62 = vector.broadcast %61 : i32 to vector<8x1xi32>
      %63 = arith.cmpi slt, %62, %23 : vector<8x1xi32>
      %cst_33 = arith.constant 0.000000e+00 : f32
      %64 = vector.shape_cast %63 : vector<8x1xi1> to vector<8x1xi1>
      %65 = vector.broadcast %64 : vector<8x1xi1> to vector<8x32xi1>
      %66 = vector.broadcast %cst_33 : f32 to vector<8x32xf32>
      %67 = arith.select %65, %60, %66 : vector<8x32xi1>, vector<8x32xf32>
      %c0_34 = arith.constant 0 : index
      %c0_35 = arith.constant 0 : index
      %68 = vector.load %arg8[%c0_34, %c0_35] : memref<8x128xf32, #tpu.memory_space<vmem>>, vector<8x32xf32>
      tpu.vector_store %arg8[%c0_34, %c0_35], %67 {strides = array<i32>} : memref<8x128xf32, #tpu.memory_space<vmem>>, vector<8x32xf32>,
      %69 = vector.shape_cast %63 : vector<8x1xi1> to vector<8x1xi1>
      %70 = vector.broadcast %69 : vector<8x1xi1> to vector<8x32xi1>
      %71 = arith.select %70, %60, %25 : vector<8x32xi1>, vector<8x32xf32>
      %72 = vector.shape_cast %63 : vector<8x1xi1> to vector<8x1xi1>
      %73 = vector.broadcast %72 : vector<8x1xi1> to vector<8x32xi1>
      %74 = arith.select %73, %58, %26 : vector<8x32xi1>, vector<8x32xf32>
      %c8 = arith.constant 8 : index
      %c0_36 = arith.constant 0 : index
      %75 = vector.load %arg11[%c8, %c0_36] : memref<32x128xf32, #tpu.memory_space<vmem>>, vector<8x128xf32>
      %cst_37 = arith.constant dense<0.000000e+00> : vector<8x128xf32>
      %76 = tpu.matmul %71, %24, %cst_37 {dimension_numbers = #tpu.dot_dimension_numbers<[1], [0], [0], [1], [0, 0, 1, 1], [], []>} : vector<8x32xf32>, vector<32x128xf32>, vector<8x128xf32> -> vector<8x128xf32>
      %77 = arith.addf %75, %76 : vector<8x128xf32>
      %78 = vector.extract_strided_slice %77 {offsets = [0, 0], sizes = [8, 32], strides = [1, 1]} : vector<8x128xf32> to vector<8x32xf32>
      %cst_38 = arith.constant 5.000000e-01 : f32
      %79 = vector.broadcast %cst_38 : f32 to vector<8x32xf32>
      %80 = arith.mulf %79, %78 : vector<8x32xf32>
      %81 = math.tanh %80 : vector<8x32xf32>
      %cst_39 = arith.constant 1.000000e+00 : f32
      %82 = vector.broadcast %cst_39 : f32 to vector<8x32xf32>
      %83 = arith.addf %81, %82 : vector<8x32xf32>
      %cst_40 = arith.constant 5.000000e-01 : f32
      %84 = vector.broadcast %cst_40 : f32 to vector<8x32xf32>
      %85 = arith.mulf %84, %83 : vector<8x32xf32>
      %86 = vector.extract_strided_slice %77 {offsets = [0, 32], sizes = [8, 32], strides = [1, 1]} : vector<8x128xf32> to vector<8x32xf32>
      %cst_41 = arith.constant 5.000000e-01 : f32
      %87 = vector.broadcast %cst_41 : f32 to vector<8x32xf32>
      %88 = arith.mulf %87, %86 : vector<8x32xf32>
      %89 = math.tanh %88 : vector<8x32xf32>
      %cst_42 = arith.constant 1.000000e+00 : f32
      %90 = vector.broadcast %cst_42 : f32 to vector<8x32xf32>
      %91 = arith.addf %89, %90 : vector<8x32xf32>
      %cst_43 = arith.constant 5.000000e-01 : f32
      %92 = vector.broadcast %cst_43 : f32 to vector<8x32xf32>
      %93 = arith.mulf %92, %91 : vector<8x32xf32>
      %94 = vector.extract_strided_slice %77 {offsets = [0, 64], sizes = [8, 32], strides = [1, 1]} : vector<8x128xf32> to vector<8x32xf32>
      %95 = math.tanh %94 : vector<8x32xf32>
      %96 = vector.extract_strided_slice %77 {offsets = [0, 96], sizes = [8, 32], strides = [1, 1]} : vector<8x128xf32> to vector<8x32xf32>
      %cst_44 = arith.constant 5.000000e-01 : f32
      %97 = vector.broadcast %cst_44 : f32 to vector<8x32xf32>
      %98 = arith.mulf %97, %96 : vector<8x32xf32>
      %99 = math.tanh %98 : vector<8x32xf32>
      %cst_45 = arith.constant 1.000000e+00 : f32
      %100 = vector.broadcast %cst_45 : f32 to vector<8x32xf32>
      %101 = arith.addf %99, %100 : vector<8x32xf32>
      %cst_46 = arith.constant 5.000000e-01 : f32
      %102 = vector.broadcast %cst_46 : f32 to vector<8x32xf32>
      %103 = arith.mulf %102, %101 : vector<8x32xf32>
      %104 = arith.mulf %93, %74 : vector<8x32xf32>
      %105 = arith.mulf %85, %95 : vector<8x32xf32>
      %106 = arith.addf %104, %105 : vector<8x32xf32>
      %107 = math.tanh %106 : vector<8x32xf32>
      %108 = arith.mulf %103, %107 : vector<8x32xf32>
      %c1_i32 = arith.constant 1 : i32
      %109 = arith.addi %0, %c1_i32 : i32
      %110 = vector.broadcast %109 : i32 to vector<8x1xi32>
      %111 = arith.cmpi slt, %110, %23 : vector<8x1xi32>
      %cst_47 = arith.constant 0.000000e+00 : f32
      %112 = vector.shape_cast %111 : vector<8x1xi1> to vector<8x1xi1>
      %113 = vector.broadcast %112 : vector<8x1xi1> to vector<8x32xi1>
      %114 = vector.broadcast %cst_47 : f32 to vector<8x32xf32>
      %115 = arith.select %113, %108, %114 : vector<8x32xi1>, vector<8x32xf32>
      %c0_48 = arith.constant 0 : index
      %c32 = arith.constant 32 : index
      %116 = vector.load %arg8[%c0_48, %c32] : memref<8x128xf32, #tpu.memory_space<vmem>>, vector<8x32xf32>
      tpu.vector_store %arg8[%c0_48, %c32], %115 {strides = array<i32>} : memref<8x128xf32, #tpu.memory_space<vmem>>, vector<8x32xf32>,
      %117 = vector.shape_cast %111 : vector<8x1xi1> to vector<8x1xi1>
      %118 = vector.broadcast %117 : vector<8x1xi1> to vector<8x32xi1>
      %119 = arith.select %118, %108, %71 : vector<8x32xi1>, vector<8x32xf32>
      %120 = vector.shape_cast %111 : vector<8x1xi1> to vector<8x1xi1>
      %121 = vector.broadcast %120 : vector<8x1xi1> to vector<8x32xi1>
      %122 = arith.select %121, %106, %74 : vector<8x32xi1>, vector<8x32xf32>
      %c16 = arith.constant 16 : index
      %c0_49 = arith.constant 0 : index
      %123 = vector.load %arg11[%c16, %c0_49] : memref<32x128xf32, #tpu.memory_space<vmem>>, vector<8x128xf32>
      %cst_50 = arith.constant dense<0.000000e+00> : vector<8x128xf32>
      %124 = tpu.matmul %119, %24, %cst_50 {dimension_numbers = #tpu.dot_dimension_numbers<[1], [0], [0], [1], [0, 0, 1, 1], [], []>} : vector<8x32xf32>, vector<32x128xf32>, vector<8x128xf32> -> vector<8x128xf32>
      %125 = arith.addf %123, %124 : vector<8x128xf32>
      %126 = vector.extract_strided_slice %125 {offsets = [0, 0], sizes = [8, 32], strides = [1, 1]} : vector<8x128xf32> to vector<8x32xf32>
      %cst_51 = arith.constant 5.000000e-01 : f32
      %127 = vector.broadcast %cst_51 : f32 to vector<8x32xf32>
      %128 = arith.mulf %127, %126 : vector<8x32xf32>
      %129 = math.tanh %128 : vector<8x32xf32>
      %cst_52 = arith.constant 1.000000e+00 : f32
      %130 = vector.broadcast %cst_52 : f32 to vector<8x32xf32>
      %131 = arith.addf %129, %130 : vector<8x32xf32>
      %cst_53 = arith.constant 5.000000e-01 : f32
      %132 = vector.broadcast %cst_53 : f32 to vector<8x32xf32>
      %133 = arith.mulf %132, %131 : vector<8x32xf32>
      %134 = vector.extract_strided_slice %125 {offsets = [0, 32], sizes = [8, 32], strides = [1, 1]} : vector<8x128xf32> to vector<8x32xf32>
      %cst_54 = arith.constant 5.000000e-01 : f32
      %135 = vector.broadcast %cst_54 : f32 to vector<8x32xf32>
      %136 = arith.mulf %135, %134 : vector<8x32xf32>
      %137 = math.tanh %136 : vector<8x32xf32>
      %cst_55 = arith.constant 1.000000e+00 : f32
      %138 = vector.broadcast %cst_55 : f32 to vector<8x32xf32>
      %139 = arith.addf %137, %138 : vector<8x32xf32>
      %cst_56 = arith.constant 5.000000e-01 : f32
      %140 = vector.broadcast %cst_56 : f32 to vector<8x32xf32>
      %141 = arith.mulf %140, %139 : vector<8x32xf32>
      %142 = vector.extract_strided_slice %125 {offsets = [0, 64], sizes = [8, 32], strides = [1, 1]} : vector<8x128xf32> to vector<8x32xf32>
      %143 = math.tanh %142 : vector<8x32xf32>
      %144 = vector.extract_strided_slice %125 {offsets = [0, 96], sizes = [8, 32], strides = [1, 1]} : vector<8x128xf32> to vector<8x32xf32>
      %cst_57 = arith.constant 5.000000e-01 : f32
      %145 = vector.broadcast %cst_57 : f32 to vector<8x32xf32>
      %146 = arith.mulf %145, %144 : vector<8x32xf32>
      %147 = math.tanh %146 : vector<8x32xf32>
      %cst_58 = arith.constant 1.000000e+00 : f32
      %148 = vector.broadcast %cst_58 : f32 to vector<8x32xf32>
      %149 = arith.addf %147, %148 : vector<8x32xf32>
      %cst_59 = arith.constant 5.000000e-01 : f32
      %150 = vector.broadcast %cst_59 : f32 to vector<8x32xf32>
      %151 = arith.mulf %150, %149 : vector<8x32xf32>
      %152 = arith.mulf %141, %122 : vector<8x32xf32>
      %153 = arith.mulf %133, %143 : vector<8x32xf32>
      %154 = arith.addf %152, %153 : vector<8x32xf32>
      %155 = math.tanh %154 : vector<8x32xf32>
      %156 = arith.mulf %151, %155 : vector<8x32xf32>
      %c2_i32_60 = arith.constant 2 : i32
      %157 = arith.addi %0, %c2_i32_60 : i32
      %158 = vector.broadcast %157 : i32 to vector<8x1xi32>
      %159 = arith.cmpi slt, %158, %23 : vector<8x1xi32>
      %cst_61 = arith.constant 0.000000e+00 : f32
      %160 = vector.shape_cast %159 : vector<8x1xi1> to vector<8x1xi1>
      %161 = vector.broadcast %160 : vector<8x1xi1> to vector<8x32xi1>
      %162 = vector.broadcast %cst_61 : f32 to vector<8x32xf32>
      %163 = arith.select %161, %156, %162 : vector<8x32xi1>, vector<8x32xf32>
      %c0_62 = arith.constant 0 : index
      %c64 = arith.constant 64 : index
      %164 = vector.load %arg8[%c0_62, %c64] : memref<8x128xf32, #tpu.memory_space<vmem>>, vector<8x32xf32>
      tpu.vector_store %arg8[%c0_62, %c64], %163 {strides = array<i32>} : memref<8x128xf32, #tpu.memory_space<vmem>>, vector<8x32xf32>,
      %165 = vector.shape_cast %159 : vector<8x1xi1> to vector<8x1xi1>
      %166 = vector.broadcast %165 : vector<8x1xi1> to vector<8x32xi1>
      %167 = arith.select %166, %156, %119 : vector<8x32xi1>, vector<8x32xf32>
      %168 = vector.shape_cast %159 : vector<8x1xi1> to vector<8x1xi1>
      %169 = vector.broadcast %168 : vector<8x1xi1> to vector<8x32xi1>
      %170 = arith.select %169, %154, %122 : vector<8x32xi1>, vector<8x32xf32>
      %c24 = arith.constant 24 : index
      %c0_63 = arith.constant 0 : index
      %171 = vector.load %arg11[%c24, %c0_63] : memref<32x128xf32, #tpu.memory_space<vmem>>, vector<8x128xf32>
      %cst_64 = arith.constant dense<0.000000e+00> : vector<8x128xf32>
      %172 = tpu.matmul %167, %24, %cst_64 {dimension_numbers = #tpu.dot_dimension_numbers<[1], [0], [0], [1], [0, 0, 1, 1], [], []>} : vector<8x32xf32>, vector<32x128xf32>, vector<8x128xf32> -> vector<8x128xf32>
      %173 = arith.addf %171, %172 : vector<8x128xf32>
      %174 = vector.extract_strided_slice %173 {offsets = [0, 0], sizes = [8, 32], strides = [1, 1]} : vector<8x128xf32> to vector<8x32xf32>
      %cst_65 = arith.constant 5.000000e-01 : f32
      %175 = vector.broadcast %cst_65 : f32 to vector<8x32xf32>
      %176 = arith.mulf %175, %174 : vector<8x32xf32>
      %177 = math.tanh %176 : vector<8x32xf32>
      %cst_66 = arith.constant 1.000000e+00 : f32
      %178 = vector.broadcast %cst_66 : f32 to vector<8x32xf32>
      %179 = arith.addf %177, %178 : vector<8x32xf32>
      %cst_67 = arith.constant 5.000000e-01 : f32
      %180 = vector.broadcast %cst_67 : f32 to vector<8x32xf32>
      %181 = arith.mulf %180, %179 : vector<8x32xf32>
      %182 = vector.extract_strided_slice %173 {offsets = [0, 32], sizes = [8, 32], strides = [1, 1]} : vector<8x128xf32> to vector<8x32xf32>
      %cst_68 = arith.constant 5.000000e-01 : f32
      %183 = vector.broadcast %cst_68 : f32 to vector<8x32xf32>
      %184 = arith.mulf %183, %182 : vector<8x32xf32>
      %185 = math.tanh %184 : vector<8x32xf32>
      %cst_69 = arith.constant 1.000000e+00 : f32
      %186 = vector.broadcast %cst_69 : f32 to vector<8x32xf32>
      %187 = arith.addf %185, %186 : vector<8x32xf32>
      %cst_70 = arith.constant 5.000000e-01 : f32
      %188 = vector.broadcast %cst_70 : f32 to vector<8x32xf32>
      %189 = arith.mulf %188, %187 : vector<8x32xf32>
      %190 = vector.extract_strided_slice %173 {offsets = [0, 64], sizes = [8, 32], strides = [1, 1]} : vector<8x128xf32> to vector<8x32xf32>
      %191 = math.tanh %190 : vector<8x32xf32>
      %192 = vector.extract_strided_slice %173 {offsets = [0, 96], sizes = [8, 32], strides = [1, 1]} : vector<8x128xf32> to vector<8x32xf32>
      %cst_71 = arith.constant 5.000000e-01 : f32
      %193 = vector.broadcast %cst_71 : f32 to vector<8x32xf32>
      %194 = arith.mulf %193, %192 : vector<8x32xf32>
      %195 = math.tanh %194 : vector<8x32xf32>
      %cst_72 = arith.constant 1.000000e+00 : f32
      %196 = vector.broadcast %cst_72 : f32 to vector<8x32xf32>
      %197 = arith.addf %195, %196 : vector<8x32xf32>
      %cst_73 = arith.constant 5.000000e-01 : f32
      %198 = vector.broadcast %cst_73 : f32 to vector<8x32xf32>
      %199 = arith.mulf %198, %197 : vector<8x32xf32>
      %200 = arith.mulf %189, %170 : vector<8x32xf32>
      %201 = arith.mulf %181, %191 : vector<8x32xf32>
      %202 = arith.addf %200, %201 : vector<8x32xf32>
      %203 = math.tanh %202 : vector<8x32xf32>
      %204 = arith.mulf %199, %203 : vector<8x32xf32>
      %c3_i32 = arith.constant 3 : i32
      %205 = arith.addi %0, %c3_i32 : i32
      %206 = vector.broadcast %205 : i32 to vector<8x1xi32>
      %207 = arith.cmpi slt, %206, %23 : vector<8x1xi32>
      %cst_74 = arith.constant 0.000000e+00 : f32
      %208 = vector.shape_cast %207 : vector<8x1xi1> to vector<8x1xi1>
      %209 = vector.broadcast %208 : vector<8x1xi1> to vector<8x32xi1>
      %210 = vector.broadcast %cst_74 : f32 to vector<8x32xf32>
      %211 = arith.select %209, %204, %210 : vector<8x32xi1>, vector<8x32xf32>
      %c0_75 = arith.constant 0 : index
      %c96 = arith.constant 96 : index
      %212 = vector.load %arg8[%c0_75, %c96] : memref<8x128xf32, #tpu.memory_space<vmem>>, vector<8x32xf32>
      tpu.vector_store %arg8[%c0_75, %c96], %211 {strides = array<i32>} : memref<8x128xf32, #tpu.memory_space<vmem>>, vector<8x32xf32>,
      %213 = vector.shape_cast %207 : vector<8x1xi1> to vector<8x1xi1>
      %214 = vector.broadcast %213 : vector<8x1xi1> to vector<8x32xi1>
      %215 = arith.select %214, %204, %167 : vector<8x32xi1>, vector<8x32xf32>
      %216 = vector.shape_cast %207 : vector<8x1xi1> to vector<8x1xi1>
      %217 = vector.broadcast %216 : vector<8x1xi1> to vector<8x32xi1>
      %218 = arith.select %217, %202, %170 : vector<8x32xi1>, vector<8x32xf32>
      %c0_76 = arith.constant 0 : index
      %c0_77 = arith.constant 0 : index
      %219 = vector.load %arg12[%c0_76, %c0_77] : memref<8x32xf32, #tpu.memory_space<vmem>>, vector<8x32xf32>
      tpu.vector_store %arg12[%c0_76, %c0_77], %215 {strides = array<i32>} : memref<8x32xf32, #tpu.memory_space<vmem>>, vector<8x32xf32>,
      %c0_78 = arith.constant 0 : index
      %c0_79 = arith.constant 0 : index
      %220 = vector.load %arg13[%c0_78, %c0_79] : memref<8x32xf32, #tpu.memory_space<vmem>>, vector<8x32xf32>
      tpu.vector_store %arg13[%c0_78, %c0_79], %218 {strides = array<i32>} : memref<8x32xf32, #tpu.memory_space<vmem>>, vector<8x32xf32>,
    } else {
    }
    %true = arith.constant true
    %9 = arith.xori %6, %true : i1
    %10 = arith.extui %9 : i1 to i32
    %c0_i32_2 = arith.constant 0 : i32
    %11 = arith.cmpi ne, %10, %c0_i32_2 : i32
    scf.if %11 {
      %cst = arith.constant 0.000000e+00 : f32
      %15 = vector.broadcast %cst : f32 to vector<8x128xf32>
      %c0 = arith.constant 0 : index
      %c0_4 = arith.constant 0 : index
      %16 = vector.load %arg8[%c0, %c0_4] : memref<8x128xf32, #tpu.memory_space<vmem>>, vector<8x128xf32>
      tpu.vector_store %arg8[%c0, %c0_4], %15 {strides = array<i32>} : memref<8x128xf32, #tpu.memory_space<vmem>>, vector<8x128xf32>,
    } else {
    }
    %c2_i32 = arith.constant 2 : i32
    %12 = arith.cmpi eq, %arg1, %c2_i32 : i32
    %13 = arith.extui %12 : i1 to i32
    %c0_i32_3 = arith.constant 0 : i32
    %14 = arith.cmpi ne, %13, %c0_i32_3 : i32
    scf.if %14 {
      %c0 = arith.constant 0 : index
      %c0_4 = arith.constant 0 : index
      %15 = vector.load %arg12[%c0, %c0_4] : memref<8x32xf32, #tpu.memory_space<vmem>>, vector<8x32xf32>
      %c0_5 = arith.constant 0 : index
      %c0_6 = arith.constant 0 : index
      %16 = vector.load %arg9[%c0_5, %c0_6] : memref<8x32xf32, #tpu.memory_space<vmem>>, vector<8x32xf32>
      tpu.vector_store %arg9[%c0_5, %c0_6], %15 {strides = array<i32>} : memref<8x32xf32, #tpu.memory_space<vmem>>, vector<8x32xf32>,
      %c0_7 = arith.constant 0 : index
      %c0_8 = arith.constant 0 : index
      %17 = vector.load %arg13[%c0_7, %c0_8] : memref<8x32xf32, #tpu.memory_space<vmem>>, vector<8x32xf32>
      %c0_9 = arith.constant 0 : index
      %c0_10 = arith.constant 0 : index
      %18 = vector.load %arg10[%c0_9, %c0_10] : memref<8x32xf32, #tpu.memory_space<vmem>>, vector<8x32xf32>
      tpu.vector_store %arg10[%c0_9, %c0_10], %17 {strides = array<i32>} : memref<8x32xf32, #tpu.memory_space<vmem>>, vector<8x32xf32>,
    } else {
    }
    return
  }
  func.func @transform_0(%arg0: i32, %arg1: i32, %arg2: memref<2xi32, #tpu.memory_space<smem>>) -> (i32, i32) {
    %c0_i32 = arith.constant 0 : i32
    %c0_i32_0 = arith.constant 0 : i32
    return %arg0, %c0_i32 : i32, i32
  }
  func.func @transform_1(%arg0: i32, %arg1: i32, %arg2: memref<2xi32, #tpu.memory_space<smem>>) -> (i32, i32, i32) {
    %c0_i32 = arith.constant 0 : i32
    %c0_i32_0 = arith.constant 0 : i32
    return %arg0, %arg1, %c0_i32 : i32, i32, i32
  }
  func.func @transform_2(%arg0: i32, %arg1: i32, %arg2: memref<2xi32, #tpu.memory_space<smem>>) -> (i32, i32) {
    %c0_i32 = arith.constant 0 : i32
    %c0_i32_0 = arith.constant 0 : i32
    %c0_i32_1 = arith.constant 0 : i32
    return %c0_i32, %c0_i32_0 : i32, i32
  }
  func.func @transform_3(%arg0: i32, %arg1: i32, %arg2: memref<2xi32, #tpu.memory_space<smem>>) -> (i32, i32) {
    %c0_i32 = arith.constant 0 : i32
    %c0_i32_0 = arith.constant 0 : i32
    %c0_i32_1 = arith.constant 0 : i32
    return %c0_i32, %c0_i32_0 : i32, i32
  }
  func.func @transform_4(%arg0: i32, %arg1: i32, %arg2: memref<2xi32, #tpu.memory_space<smem>>) -> (i32, i32) {
    %c0_i32 = arith.constant 0 : i32
    %c0_i32_0 = arith.constant 0 : i32
    %c0_i32_1 = arith.constant 0 : i32
    return %c0_i32, %c0_i32_0 : i32, i32
  }
  func.func @transform_5(%arg0: i32, %arg1: i32, %arg2: memref<2xi32, #tpu.memory_space<smem>>) -> (i32, i32) {
    %c0_i32 = arith.constant 0 : i32
    return %arg0, %arg1 : i32, i32
  }
  func.func @transform_6(%arg0: i32, %arg1: i32, %arg2: memref<2xi32, #tpu.memory_space<smem>>) -> (i32, i32) {
    %c0_i32 = arith.constant 0 : i32
    %c0_i32_0 = arith.constant 0 : i32
    return %arg0, %c0_i32 : i32, i32
  }
  func.func @transform_7(%arg0: i32, %arg1: i32, %arg2: memref<2xi32, #tpu.memory_space<smem>>) -> (i32, i32) {
    %c0_i32 = arith.constant 0 : i32
    %c0_i32_0 = arith.constant 0 : i32
    return %arg0, %c0_i32 : i32, i32
  }
}

</mosaic_0001>

<llo_original>
// kernel: lstm_forward.1
$region0: #{lstm_forward.1}
  #allocation0 [shape = 'u32[]', space=smem, size = 0x4, offset = 0x4, fixed_abs, tag = 'smem constant byte address 0x4 - core index']
  #allocation1 [shape = 'u32[72,128]{1,0:T(1,128)}', space=vmem, size = 0x9000, scoped, tag = 'internal scratch']
  #allocation2 [shape = 'f32[32,128]{1,0:T(8,128)}', space=vmem, size = 0x4000, scoped, tag = 'scratch operand']
  #allocation3 [shape = 'f32[8,32]{1,0:T(8,128)}', space=vmem, size = 0x1000, scoped, tag = 'scratch operand']
  #allocation4 [shape = 'f32[8,32]{1,0:T(8,128)}', space=vmem, size = 0x1000, scoped, tag = 'scratch operand']
  #allocation5 [shape = 's32[1]{0}', space=sflag, size = 0x4, scoped, tag = 'scoped memory for lstm_forward.1']
  #allocation6 [shape = 'u8[512]{0}', space=smem, size = 0x200, scoped, tag = 'prefetched SMEM operand 0']
  %s0 = inlined_call_operand.vmem [shape: s32[2], index: 0, kind: input, shape index: {}]
  %s1 = inlined_call_operand.vmem [shape: s32[16,1], index: 1, kind: input, shape index: {}]
  %s2 = inlined_call_operand.vmem [shape: bf16[2,96,16], index: 2, kind: input, shape index: {}]
  %s3 = inlined_call_operand.vmem [shape: bf16[16,128], index: 3, kind: input, shape index: {}]
  %s4 = inlined_call_operand.vmem [shape: f32[32,128], index: 4, kind: input, shape index: {}]
  %s5 = inlined_call_operand.vmem [shape: f32[1,128], index: 5, kind: input, shape index: {}]
  %s6 = inlined_call_operand.vmem [shape: f32[16,384], index: 6, kind: output, shape index: {0}]
  %s7 = inlined_call_operand.vmem [shape: f32[16,32], index: 7, kind: output, shape index: {1}]
  %s8 = inlined_call_operand.vmem [shape: f32[16,32], index: 8, kind: output, shape index: {2}]
  %9 = xla_tuple %s6, %s7, %s8
  %s10 = sld [smem:[#allocation0]]
  $region85: #{lstm_forward.1} parent=0
    _
  %s12 = ssub.s32 1, %s10
  %s13 = scalar_select 0, %s12, %s10
  %s15 = sshll.u32 %s0, 4
  %s16 = int_to_ptr.vmem [resolvable:$true] %s15
  %18 = dma.vmem_to_smem %s16, 16, [#allocation6], [#allocation5]
  %20 = dma.done [#allocation5], 16
  %21 = sfence
  loop: start=0, step=1, limit=8
  $region2: #{lstm_forward.1} parent=0 // loop_pre_header
    _
  $region3: #{lstm_forward.1} parent=0 // loop_header
    %s23 = sphi 0, %s27
    %p24 = scmp.ge.s32.totalorder %s23, 8
    %s30 = sphi 0, %s42
    %s31 = sphi 0, %s38
    %s32 = sphi 0, %s30
    %s33 = sphi 0, %s31
    %s34 = sphi 0, %s32
    %s35 = sphi 0, %s33
    %s45 = sphi 0, %s47
    %s48 = sphi 0, %s45
    %s49 = sphi 0, %s48
    %s65 = sphi 0, %s49
    %s73 = sphi 0, %s75
    %s76 = sphi 0, %s73
    %s77 = sphi 0, %s76
    %s93 = sphi 0, %s77
    %s97 = sphi 0, %s97
    %s99 = sphi 0, %s97
    %s100 = sphi 0, %s99
    %s114 = sphi 0, %s100
    %s118 = sphi 0, %s118
    %s120 = sphi 0, %s118
    %s121 = sphi 0, %s120
    %s135 = sphi 0, %s121
    %s139 = sphi 0, %s139
    %s141 = sphi 0, %s139
    %s142 = sphi 0, %s141
    %s156 = sphi 0, %s142
    %s164 = sphi 0, %s166
    %s167 = sphi 0, %s164
    %s168 = sphi 0, %s167
    %s184 = sphi 0, %s168
    %s190 = sphi 0, %s192
    %s193 = sphi 0, %s190
    %s194 = sphi 0, %s193
    %s210 = sphi 0, %s194
    %s216 = sphi 0, %s218
    %s219 = sphi 0, %s216
    %s220 = sphi 0, %s219
    %s236 = sphi 0, %s220
  $region4: #{lstm_forward.1} parent=0 // loop_header_branch
    %26 = sbr.rel (%p24) target = $region8
  $region5: #{lstm_forward.1} parent=0 // loop_body
    %s28 = ssub.s32 %s23, 1
    %s29 = ssub.s32 %s23, 2
    %s36 = sadd.s32 1, %s31
    %p37 = scmp.ge.s32.totalorder %s36, 3
    %s38 = scalar_select %p37, 0, %s36
    %s39 = sadd.s32 1, %s30
    %s40 = scalar_select %p37, %s39, %s30
    %p41 = scmp.ge.s32.totalorder %s40, 2
    %s42 = scalar_select %p41, 0, %s40
    %s43 = ssub.s32 %s30, %s42
    %p44 = scmp.eq.s32.totalorder %s43, 0
    %s46 = sadd.s32 %s45, 1
    %s47 = scalar_select %p44, %s45, %s46
    %p50 = pneg %p44
    %p51 = scmp.eq.s32.totalorder %s23, 5
    %p52 = por %p50, %p51
    %p53 = scmp.ne.s32.totalorder %s45, %s48
    %p54 = scmp.eq.s32.totalorder %s23, 0
    %p55 = por %p53, %p54
    %p56 = scmp.ne.s32.totalorder %s45, %s48
    %p57 = scmp.eq.s32.totalorder %s28, 5
    %p58 = por %p56, %p57
    %p59 = scmp.ne.s32.totalorder %s48, %s49
    %p60 = scmp.eq.s32.totalorder %s28, 0
    %p61 = por %p59, %p60
    %p62 = scmp.ne.s32.totalorder %s48, %s49
    %p63 = scmp.eq.s32.totalorder %s29, 5
    %p64 = por %p62, %p63
    %p66 = scmp.ne.s32.totalorder %s49, %s65
    %p67 = scmp.eq.s32.totalorder %s29, 0
    %p68 = por %p66, %p67
    %s69 = ssub.s32 %s30, %s42
    %s70 = ssub.s32 %s31, %s38
    %s71 = sor.u32 %s69, %s70
    %p72 = scmp.eq.s32.totalorder %s71, 0
    %s74 = sadd.s32 %s73, 1
    %s75 = scalar_select %p72, %s73, %s74
    %p78 = pneg %p72
    %p79 = scmp.eq.s32.totalorder %s23, 5
    %p80 = por %p78, %p79
    %p81 = scmp.ne.s32.totalorder %s73, %s76
    %p82 = scmp.eq.s32.totalorder %s23, 0
    %p83 = por %p81, %p82
    %p84 = scmp.ne.s32.totalorder %s73, %s76
    %p85 = scmp.eq.s32.totalorder %s28, 5
    %p86 = por %p84, %p85
    %p87 = scmp.ne.s32.totalorder %s76, %s77
    %p88 = scmp.eq.s32.totalorder %s28, 0
    %p89 = por %p87, %p88
    %p90 = scmp.ne.s32.totalorder %s76, %s77
    %p91 = scmp.eq.s32.totalorder %s29, 5
    %p92 = por %p90, %p91
    %p94 = scmp.ne.s32.totalorder %s77, %s93
    %p95 = scmp.eq.s32.totalorder %s29, 0
    %p96 = por %p94, %p95
    %s98 = sadd.s32 %s97, 1
    %p101 = scmp.eq.s32.totalorder %s23, 5
    %p102 = scmp.ne.s32.totalorder %s97, %s99
    %p103 = scmp.eq.s32.totalorder %s23, 0
    %p104 = por %p102, %p103
    %p105 = scmp.ne.s32.totalorder %s97, %s99
    %p106 = scmp.eq.s32.totalorder %s28, 5
    %p107 = por %p105, %p106
    %p108 = scmp.ne.s32.totalorder %s99, %s100
    %p109 = scmp.eq.s32.totalorder %s28, 0
    %p110 = por %p108, %p109
    %p111 = scmp.ne.s32.totalorder %s99, %s100
    %p112 = scmp.eq.s32.totalorder %s29, 5
    %p113 = por %p111, %p112
    %p115 = scmp.ne.s32.totalorder %s100, %s114
    %p116 = scmp.eq.s32.totalorder %s29, 0
    %p117 = por %p115, %p116
    %s119 = sadd.s32 %s118, 1
    %p122 = scmp.eq.s32.totalorder %s23, 5
    %p123 = scmp.ne.s32.totalorder %s118, %s120
    %p124 = scmp.eq.s32.totalorder %s23, 0
    %p125 = por %p123, %p124
    %p126 = scmp.ne.s32.totalorder %s118, %s120
    %p127 = scmp.eq.s32.totalorder %s28, 5
    %p128 = por %p126, %p127
    %p129 = scmp.ne.s32.totalorder %s120, %s121
    %p130 = scmp.eq.s32.totalorder %s28, 0
    %p131 = por %p129, %p130
    %p132 = scmp.ne.s32.totalorder %s120, %s121
    %p133 = scmp.eq.s32.totalorder %s29, 5
    %p134 = por %p132, %p133
    %p136 = scmp.ne.s32.totalorder %s121, %s135
    %p137 = scmp.eq.s32.totalorder %s29, 0
    %p138 = por %p136, %p137
    %s140 = sadd.s32 %s139, 1
    %p143 = scmp.eq.s32.totalorder %s23, 5
    %p144 = scmp.ne.s32.totalorder %s139, %s141
    %p145 = scmp.eq.s32.totalorder %s23, 0
    %p146 = por %p144, %p145
    %p147 = scmp.ne.s32.totalorder %s139, %s141
    %p148 = scmp.eq.s32.totalorder %s28, 5
    %p149 = por %p147, %p148
    %p150 = scmp.ne.s32.totalorder %s141, %s142
    %p151 = scmp.eq.s32.totalorder %s28, 0
    %p152 = por %p150, %p151
    %p153 = scmp.ne.s32.totalorder %s141, %s142
    %p154 = scmp.eq.s32.totalorder %s29, 5
    %p155 = por %p153, %p154
    %p157 = scmp.ne.s32.totalorder %s142, %s156
    %p158 = scmp.eq.s32.totalorder %s29, 0
    %p159 = por %p157, %p158
    %s160 = ssub.s32 %s30, %s42
    %s161 = ssub.s32 %s31, %s38
    %s162 = sor.u32 %s160, %s161
    %p163 = scmp.eq.s32.totalorder %s162, 0
    %s165 = sadd.s32 %s164, 1
    %s166 = scalar_select %p163, %s164, %s165
    %p169 = pneg %p163
    %p170 = scmp.eq.s32.totalorder %s23, 5
    %p171 = por %p169, %p170
    %p172 = scmp.ne.s32.totalorder %s164, %s167
    %p173 = scmp.eq.s32.totalorder %s23, 0
    %p174 = por %p172, %p173
    %p175 = scmp.ne.s32.totalorder %s164, %s167
    %p176 = scmp.eq.s32.totalorder %s28, 5
    %p177 = por %p175, %p176
    %p178 = scmp.ne.s32.totalorder %s167, %s168
    %p179 = scmp.eq.s32.totalorder %s28, 0
    %p180 = por %p178, %p179
    %p181 = scmp.ne.s32.totalorder %s167, %s168
    %p182 = scmp.eq.s32.totalorder %s29, 5
    %p183 = por %p181, %p182
    %p185 = scmp.ne.s32.totalorder %s168, %s184
    %p186 = scmp.eq.s32.totalorder %s29, 0
    %p187 = por %p185, %p186
    %s188 = ssub.s32 %s30, %s42
    %p189 = scmp.eq.s32.totalorder %s188, 0
    %s191 = sadd.s32 %s190, 1
    %s192 = scalar_select %p189, %s190, %s191
    %p195 = pneg %p189
    %p196 = scmp.eq.s32.totalorder %s23, 5
    %p197 = por %p195, %p196
    %p198 = scmp.ne.s32.totalorder %s190, %s193
    %p199 = scmp.eq.s32.totalorder %s23, 0
    %p200 = por %p198, %p199
    %p201 = scmp.ne.s32.totalorder %s190, %s193
    %p202 = scmp.eq.s32.totalorder %s28, 5
    %p203 = por %p201, %p202
    %p204 = scmp.ne.s32.totalorder %s193, %s194
    %p205 = scmp.eq.s32.totalorder %s28, 0
    %p206 = por %p204, %p205
    %p207 = scmp.ne.s32.totalorder %s193, %s194
    %p208 = scmp.eq.s32.totalorder %s29, 5
    %p209 = por %p207, %p208
    %p211 = scmp.ne.s32.totalorder %s194, %s210
    %p212 = scmp.eq.s32.totalorder %s29, 0
    %p213 = por %p211, %p212
    %s214 = ssub.s32 %s30, %s42
    %p215 = scmp.eq.s32.totalorder %s214, 0
    %s217 = sadd.s32 %s216, 1
    %s218 = scalar_select %p215, %s216, %s217
    %p221 = pneg %p215
    %p222 = scmp.eq.s32.totalorder %s23, 5
    %p223 = por %p221, %p222
    %p224 = scmp.ne.s32.totalorder %s216, %s219
    %p225 = scmp.eq.s32.totalorder %s23, 0
    %p226 = por %p224, %p225
    %p227 = scmp.ne.s32.totalorder %s216, %s219
    %p228 = scmp.eq.s32.totalorder %s28, 5
    %p229 = por %p227, %p228
    %p230 = scmp.ne.s32.totalorder %s219, %s220
    %p231 = scmp.eq.s32.totalorder %s28, 0
    %p232 = por %p230, %p231
    %p233 = scmp.ne.s32.totalorder %s219, %s220
    %p234 = scmp.eq.s32.totalorder %s29, 5
    %p235 = por %p233, %p234
    %p237 = scmp.ne.s32.totalorder %s220, %s236
    %p238 = scmp.eq.s32.totalorder %s29, 0
    %p239 = por %p237, %p238
    %p240 = scmp.le.s32.totalorder 1, %s23
    %p241 = scmp.lt.s32.totalorder %s23, 7
    %p242 = pnand %p240, %p241
    %p243 = pneg %p242
    // Predicated region
    $region9: #{lstm_forward.1} parent=5 // pred_check
      _
    $region10: #{lstm_forward.1} parent=5 // pred_check_branch
      %245 = sbr.rel (%p242) target = $region12
    $region11: #{lstm_forward.1} parent=5 // pred_region
      %s246 = ssub.s32 %s23, 1
      // Predicated region
      $region13: #{lstm_forward.1} parent=11 // pred_check
        %p247 = pneg %p110
      $region14: #{lstm_forward.1} parent=11 // pred_check_branch
        %249 = sbr.rel (%p247) target = $region16
      $region15: #{lstm_forward.1} parent=11 // pred_region
        _
      $region16: #{lstm_forward.1} parent=11 // pred_fallthru
        _
      // Predicated region
      $region17: #{lstm_forward.1} parent=11 // pred_check
        %p250 = pneg %p131
      $region18: #{lstm_forward.1} parent=11 // pred_check_branch
        %252 = sbr.rel (%p250) target = $region20
      $region19: #{lstm_forward.1} parent=11 // pred_region
        _
      $region20: #{lstm_forward.1} parent=11 // pred_fallthru
        _
      // Predicated region
      $region21: #{lstm_forward.1} parent=11 // pred_check
        %p253 = pneg %p152
      $region22: #{lstm_forward.1} parent=11 // pred_check_branch
        %255 = sbr.rel (%p253) target = $region24
      $region23: #{lstm_forward.1} parent=11 // pred_region
        _
      $region24: #{lstm_forward.1} parent=11 // pred_fallthru
        _
    $region12: #{lstm_forward.1} parent=5 // pred_fallthru
      _
    %p256 = scmp.lt.s32.totalorder %s23, 6
    // Predicated region
    $region25: #{lstm_forward.1} parent=5 // pred_check
      %p257 = pneg %p256
    $region26: #{lstm_forward.1} parent=5 // pred_check_branch
      %259 = sbr.rel (%p257) target = $region28
    $region27: #{lstm_forward.1} parent=5 // pred_region
      // Predicated region
      $region29: #{lstm_forward.1} parent=27 // pred_check
        %p260 = pneg %p55
      $region30: #{lstm_forward.1} parent=27 // pred_check_branch
        %262 = sbr.rel (%p260) target = $region32
      $region31: #{lstm_forward.1} parent=27 // pred_region
        %p263 = scmp.lt.s32.totalorder %s30, 1
        %s264 = scalar_select %p263, %s30, 1
        %s265 = smul.addr %s264, 8
        %s266 = scalar_lea.vmem %s1, %s265
      $region32: #{lstm_forward.1} parent=27 // pred_fallthru
        _
      // Predicated region
      $region33: #{lstm_forward.1} parent=27 // pred_check
        %p267 = pneg %p83
      $region34: #{lstm_forward.1} parent=27 // pred_check_branch
        %269 = sbr.rel (%p267) target = $region36
      $region35: #{lstm_forward.1} parent=27 // pred_region
        %s270 = smul.u32 4, %s31
        %p271 = scmp.lt.s32.totalorder %s30, 1
        %s272 = scalar_select %p271, %s30, 1
        %p273 = scmp.lt.s32.totalorder %s270, 11
        %s274 = scalar_select %p273, %s270, 11
        %s275 = smul.addr %s272, 12
        %s276 = sadd.s32 %s274, %s275
        %s277 = smul.addr %s276, 4
        %s278 = scalar_lea.vmem %s2, %s277
        %s279 = smul.u32 4, %s31
      $region36: #{lstm_forward.1} parent=27 // pred_fallthru
        _
    $region28: #{lstm_forward.1} parent=5 // pred_fallthru
      _
    %p280 = scmp.le.s32.totalorder 1, %s23
    %p281 = scmp.lt.s32.totalorder %s23, 7
    %p282 = pnand %p280, %p281
    %p283 = pneg %p282
    // Predicated region
    $region37: #{lstm_forward.1} parent=5 // pred_check
      _
    $region38: #{lstm_forward.1} parent=5 // pred_check_branch
      %285 = sbr.rel (%p282) target = $region40
    $region39: #{lstm_forward.1} parent=5 // pred_region
      %s286 = ssub.s32 %s23, 1
      %p287 = scmp.lt.s32.totalorder %s32, 1
      %s288 = scalar_select %p287, %s32, 1
      %s289 = smul.addr %s288, 8
      %s290 = scalar_lea.vmem %s1, %s289
      %p291 = pneg %p61
      %p292 = pneg %p58
      %s293 = smul.u32 4, %s33
      %p294 = scmp.lt.s32.totalorder %s32, 1
      %s295 = scalar_select %p294, %s32, 1
      %p296 = scmp.lt.s32.totalorder %s293, 11
      %s297 = scalar_select %p296, %s293, 11
      %s298 = smul.addr %s295, 12
      %s299 = sadd.s32 %s297, %s298
      %s300 = smul.addr %s299, 4
      %s301 = scalar_lea.vmem %s2, %s300
      %p302 = pneg %p89
      %p303 = pneg %p86
      %p304 = pneg %p110
      %p305 = pneg %p107
      %p306 = pneg %p131
      %p307 = pneg %p128
      %p308 = pneg %p152
      %p309 = pneg %p149
      %p310 = pneg %p180
      %p311 = pneg %p177
      %p312 = scmp.lt.s32.totalorder %s32, 1
      %s313 = scalar_select %p312, %s32, 1
      %p314 = scmp.lt.s32.totalorder %s33, 2
      %s315 = scalar_select %p314, %s33, 2
      %s316 = smul.addr %s313, 3
      %s317 = sadd.s32 %s315, %s316
      %s318 = smul.addr %s317, 8
      %s319 = scalar_lea.vmem %s6, %s318
      %p320 = pneg %p206
      %p321 = pneg %p203
      %p322 = scmp.lt.s32.totalorder %s32, 1
      %s323 = scalar_select %p322, %s32, 1
      %s324 = smul.addr %s323, 8
      %s325 = scalar_lea.vmem %s7, %s324
      %p326 = pneg %p232
      %p327 = pneg %p229
      %p328 = scmp.lt.s32.totalorder %s32, 1
      %s329 = scalar_select %p328, %s32, 1
      %s330 = smul.addr %s329, 8
      %s331 = scalar_lea.vmem %s8, %s330
      %p332 = scmp.lt.s32.totalorder %s32, 1
      %s333 = scalar_select %p332, %s32, 1
      %s334 = smul.addr %s333, 8
      %s335 = scalar_lea.vmem %s1, %s334
      %s336 = smul.u32 4, %s33
      %p337 = scmp.lt.s32.totalorder %s32, 1
      %s338 = scalar_select %p337, %s32, 1
      %p339 = scmp.lt.s32.totalorder %s336, 11
      %s340 = scalar_select %p339, %s336, 11
      %s341 = smul.addr %s338, 12
      %s342 = sadd.s32 %s340, %s341
      %s343 = smul.addr %s342, 4
      %s344 = scalar_lea.vmem %s2, %s343
      %s345 = smul.u32 4, %s33
      %p346 = scmp.lt.s32.totalorder %s32, 1
      %s347 = scalar_select %p346, %s32, 1
      %p348 = scmp.lt.s32.totalorder %s33, 2
      %s349 = scalar_select %p348, %s33, 2
      %s350 = smul.addr %s347, 3
      %s351 = sadd.s32 %s349, %s350
      %s352 = smul.addr %s351, 8
      %s353 = scalar_lea.vmem %s6, %s352
      %p354 = scmp.lt.s32.totalorder %s32, 1
      %s355 = scalar_select %p354, %s32, 1
      %s356 = smul.addr %s355, 8
      %s357 = scalar_lea.vmem %s7, %s356
      %p358 = scmp.lt.s32.totalorder %s32, 1
      %s359 = scalar_select %p358, %s32, 1
      %s360 = smul.addr %s359, 8
      %s361 = scalar_lea.vmem %s8, %s360
      %s363 = smul.u32 %s33, 4
      %p364 = scmp.eq.s32.totalorder %s33, 0
      // Predicated region
      $region41: #{lstm_forward.1} parent=39 // pred_check
        %p365 = pneg %p364
      $region42: #{lstm_forward.1} parent=39 // pred_check_branch
        %367 = sbr.rel (%p365) target = $region44
      $region43: #{lstm_forward.1} parent=39 // pred_region
        %vm368 = vcmask 261120
        %369 = vst.msk [vmem:[#allocation3] sm:$0xff] %vm368, 0.0
        %370 = vst.msk [vmem:[#allocation4] sm:$0xff] %vm368, 0.0
      $region44: #{lstm_forward.1} parent=39 // pred_fallthru
        _
      %s371 = sld [smem:[#allocation6 + %s32]]
      %p372 = scmp.lt.s32.totalorder %s363, %s371
      // Predicated region
      $region45: #{lstm_forward.1} parent=39 // pred_check
        %p373 = pneg %p372
      $region46: #{lstm_forward.1} parent=39 // pred_check_branch
        %375 = sbr.rel (%p373) target = $region48
      $region47: #{lstm_forward.1} parent=39 // pred_region
        %v376 = vld [vmem:[%s344] sm:$0xf]
        %v377 = vld [vmem:[%s344 + $0x4] sm:$0xf]
        %v378 = vld [vmem:[%s344 + $0x8] sm:$0xf]
        %v379 = vld [vmem:[%s344 + $0xc] sm:$0xf]
        %v380 = vld [vmem:[%s3] sm:$0xf]
        %v381 = vld [vmem:[%s3 + $0x4] sm:$0xf]
        %v382 = vld [vmem:[%s5] sm:$0x1]
        %v384 = vperm.slane %v382, 0
        %v390 = vunpack.c.l.b16 %v376
        %v391 = vunpack.c.l.b16 %v377
        %v392 = vunpack.c.l.b16 %v378
        %v393 = vunpack.c.l.b16 %v379
        %v394 = vpack.c.b16 %v391, %v390
        %v395 = vpack.c.b16 %v393, %v392
        %v398 = vunpack.c.l.b16 %v380
        %v399 = vunpack.c.l.b16 %v381
        %v400 = vpack.c.b16 %v399, %v398
        %vm402 = vcmask 130048
        %v404 = vsel %vm402, %v394, 0
        %v407 = vsel %vm402, %v395, 0
        %409 = vmatpush.bf16.msra.mxu0 0
        %410 = vmatpush.bf16.msra.mxu0 0
        %411 = vmatpush.bf16.msra.mxu0 0
        %412 = vmatpush.bf16.msra.mxu0 0
        %413 = vmatpush.bf16.msra.mxu0 0
        %414 = vmatpush.bf16.msra.mxu0 0
        %415 = vmatpush.bf16.msra.mxu0 0
        %416 = vmatpush.bf16.msra.mxu0 %v400
        %417 = vmatmul.bf16.gmra.mxu0 %v404
        %v418 = vpop.f32.mrf.mxu0
        %v419 = vadd.f32 %v384, %v418
        %v420 = vpop.f32.mrf.mxu0
        %v421 = vadd.f32 %v384, %v420
        %422 = vmatmul.bf16.gmra.mxu0 %v407
        %v423 = vpop.f32.mrf.mxu0
        %v424 = vadd.f32 %v384, %v423
        %v425 = vpop.f32.mrf.mxu0
        %v426 = vadd.f32 %v384, %v425
        %427 = vdwg.mxu0
        %428 = vst [vmem:[#allocation2] sm:$0xff] %v419
        %429 = vst [vmem:[#allocation2 + $0x8] sm:$0xff] %v421
        %430 = vst [vmem:[#allocation2 + $0x10] sm:$0xff] %v424
        %431 = vst [vmem:[#allocation2 + $0x18] sm:$0xff] %v426
        %v432 = vld [vmem:[%s335] sm:$0xff]
        %v433 = vld [vmem:[%s4] sm:$0xff]
        %v434 = vld [vmem:[%s4 + $0x8] sm:$0xff]
        %v435 = vld [vmem:[%s4 + $0x10] sm:$0xff]
        %v436 = vld [vmem:[%s4 + $0x18] sm:$0xff]
        %v437 = vld [vmem:[#allocation3] sm:$0xff]
        %v438 = vld [vmem:[#allocation4] sm:$0xff]
        %v439 = vld [vmem:[#allocation2] sm:$0xff]
        %vm440 = vcmask 261120
        %v442 = vsel %vm440, %v437, 0
        %444 = vmatpush.msra.mxu0 0.0
        %445 = vmatpush.msra.mxu0 0.0
        %446 = vmatpush.msra.mxu0 0.0
        %447 = vmatpush.msra.mxu0 0.0
        %448 = vmatpush.msra.mxu0 0.0
        %449 = vmatpush.msra.mxu0 0.0
        %450 = vmatpush.msra.mxu0 0.0
        %451 = vmatpush.msra.mxu0 0.0
        %452 = vmatpush.msra.mxu0 0.0
        %453 = vmatpush.msra.mxu0 0.0
        %454 = vmatpush.msra.mxu0 0.0
        %455 = vmatpush.msra.mxu0 0.0
        %456 = vmatpush.msra.mxu0 %v436
        %457 = vmatpush.msra.mxu0 %v435
        %458 = vmatpush.msra.mxu0 %v434
        %459 = vmatpush.msra.mxu0 %v433
        %460 = vmatmul.f32.gmra.mxu0 %v442
        %v461 = vpop.f32.mrf.mxu0
        %v462 = vadd.f32 0.0, %v461
        %463 = vdwg.mxu0
        %v464 = vadd.f32 %v439, %v462
        %v465 = vmul.f32 %v464, 0.5
        %v466 = vtanh.pop %v465
        %v467 = vadd.f32 %v466, 1.0
        %v468 = vmul.f32 %v467, 0.5
        %v469 = vtanh.pop %v464
        %471 = vrot.lane.b32.xlu0 %v438, 32
        %v472 = vpop.permute.xlu0 %471
        %v474 = vmul.f32 %v468, %v472
        %476 = vrot.lane.b32.xlu0 %v469, 64
        %v477 = vpop.permute.xlu0 %476
        %v479 = vmul.f32 %v468, %v477
        %481 = vrot.lane.b32.xlu0 %v479, 32
        %v482 = vpop.permute.xlu0 %481
        %v484 = vadd.f32 %v474, %v482
        %v485 = vtanh.pop %v484
        %487 = vrot.lane.b32.xlu0 %v485, 64
        %v488 = vpop.permute.xlu0 %487
        %v490 = vmul.f32 %v468, %v488
        %v491 = vstv %s363
        %vm492 = vcmp.lt.s32.totalorder %v491, %v432
        %v493 = vsel %vm492, 1, 0
        %494 = vset.pattern.permute.xlu0 0
        %495 = vperm.xlu0 %494, %v493
        %v496 = vpop.permute.xlu0 %495
        %vm497 = vcmp.eq.s32.totalorder %v496, 1
        %v498 = vsel %vm497, %v490, 0.0
        %500 = vrot.lane.b32.xlu0 %v498, 32
        %v501 = vpop.permute.xlu0 %500
        %503 = vst.msk [vmem:[%s353] sm:$0xff] %vm440, %v501
        %504 = vrot.lane.b32.xlu0 %v437, 96
        %v505 = vpop.permute.xlu0 %504
        %v507 = vsel %vm497, %v490, %v505
        %v508 = vsel %vm497, %v484, %v472
        %v509 = vld [vmem:[#allocation2 + $0x8] sm:$0xff]
        %511 = vrot.lane.b32.xlu0 %v507, 32
        %v512 = vpop.permute.xlu0 %511
        %v513 = vsel %vm440, %v512, 0
        %515 = vmatpush.msra.mxu0 0.0
        %516 = vmatpush.msra.mxu0 0.0
        %517 = vmatpush.msra.mxu0 0.0
        %518 = vmatpush.msra.mxu0 0.0
        %519 = vmatpush.msra.mxu0 0.0
        %520 = vmatpush.msra.mxu0 0.0
        %521 = vmatpush.msra.mxu0 0.0
        %522 = vmatpush.msra.mxu0 0.0
        %523 = vmatpush.msra.mxu0 0.0
        %524 = vmatpush.msra.mxu0 0.0
        %525 = vmatpush.msra.mxu0 0.0
        %526 = vmatpush.msra.mxu0 0.0
        %527 = vmatpush.msra.mxu0 %v436
        %528 = vmatpush.msra.mxu0 %v435
        %529 = vmatpush.msra.mxu0 %v434
        %530 = vmatpush.msra.mxu0 %v433
        %531 = vmatmul.f32.gmra.mxu0 %v513
        %v532 = vpop.f32.mrf.mxu0
        %v533 = vadd.f32 0.0, %v532
        %534 = vdwg.mxu0
        %v535 = vadd.f32 %v509, %v533
        %v536 = vmul.f32 %v535, 0.5
        %v537 = vtanh.pop %v536
        %v538 = vadd.f32 %v537, 1.0
        %v539 = vmul.f32 %v538, 0.5
        %v540 = vtanh.pop %v535
        %v541 = vmul.f32 %v539, %v508
        %543 = vrot.lane.b32.xlu0 %v540, 64
        %v544 = vpop.permute.xlu0 %543
        %v546 = vmul.f32 %v539, %v544
        %548 = vrot.lane.b32.xlu0 %v546, 32
        %v549 = vpop.permute.xlu0 %548
        %v551 = vadd.f32 %v541, %v549
        %v552 = vtanh.pop %v551
        %554 = vrot.lane.b32.xlu0 %v552, 64
        %v555 = vpop.permute.xlu0 %554
        %v557 = vmul.f32 %v539, %v555
        %s558 = sadd.s32 %s363, 1
        %v559 = vstv %s558
        %vm560 = vcmp.lt.s32.totalorder %v559, %v432
        %v561 = vsel %vm560, 1, 0
        %562 = vset.pattern.permute.xlu0 0
        %563 = vperm.xlu0 %562, %v561
        %v564 = vpop.permute.xlu0 %563
        %vm565 = vcmp.eq.s32.totalorder %v564, 1
        %v566 = vsel %vm565, %v557, 0.0
        %568 = vrot.lane.b32.xlu0 %v566, 64
        %v569 = vpop.permute.xlu0 %568
        %vm571 = vcmask 523520
        %572 = vst.msk [vmem:[%s353] sm:$0xff] %vm571, %v569
        %v573 = vsel %vm565, %v557, %v507
        %v574 = vsel %vm565, %v551, %v508
        %v575 = vld [vmem:[#allocation2 + $0x10] sm:$0xff]
        %577 = vrot.lane.b32.xlu0 %v573, 32
        %v578 = vpop.permute.xlu0 %577
        %v579 = vsel %vm440, %v578, 0
        %581 = vmatpush.msra.mxu0 0.0
        %582 = vmatpush.msra.mxu0 0.0
        %583 = vmatpush.msra.mxu0 0.0
        %584 = vmatpush.msra.mxu0 0.0
        %585 = vmatpush.msra.mxu0 0.0
        %586 = vmatpush.msra.mxu0 0.0
        %587 = vmatpush.msra.mxu0 0.0
        %588 = vmatpush.msra.mxu0 0.0
        %589 = vmatpush.msra.mxu0 0.0
        %590 = vmatpush.msra.mxu0 0.0
        %591 = vmatpush.msra.mxu0 0.0
        %592 = vmatpush.msra.mxu0 0.0
        %593 = vmatpush.msra.mxu0 %v436
        %594 = vmatpush.msra.mxu0 %v435
        %595 = vmatpush.msra.mxu0 %v434
        %596 = vmatpush.msra.mxu0 %v433
        %597 = vmatmul.f32.gmra.mxu0 %v579
        %v598 = vpop.f32.mrf.mxu0
        %v599 = vadd.f32 0.0, %v598
        %600 = vdwg.mxu0
        %v601 = vadd.f32 %v575, %v599
        %v602 = vmul.f32 %v601, 0.5
        %v603 = vtanh.pop %v602
        %v604 = vadd.f32 %v603, 1.0
        %v605 = vmul.f32 %v604, 0.5
        %v606 = vtanh.pop %v601
        %v607 = vmul.f32 %v605, %v574
        %609 = vrot.lane.b32.xlu0 %v606, 64
        %v610 = vpop.permute.xlu0 %609
        %v612 = vmul.f32 %v605, %v610
        %614 = vrot.lane.b32.xlu0 %v612, 32
        %v615 = vpop.permute.xlu0 %614
        %v617 = vadd.f32 %v607, %v615
        %v618 = vtanh.pop %v617
        %620 = vrot.lane.b32.xlu0 %v618, 64
        %v621 = vpop.permute.xlu0 %620
        %v623 = vmul.f32 %v605, %v621
        %s624 = sadd.s32 %s363, 2
        %v625 = vstv %s624
        %vm626 = vcmp.lt.s32.totalorder %v625, %v432
        %v627 = vsel %vm626, 1, 0
        %628 = vset.pattern.permute.xlu0 0
        %629 = vperm.xlu0 %628, %v627
        %v630 = vpop.permute.xlu0 %629
        %vm631 = vcmp.eq.s32.totalorder %v630, 1
        %v632 = vsel %vm631, %v623, 0.0
        %634 = vrot.lane.b32.xlu0 %v632, 96
        %v635 = vpop.permute.xlu0 %634
        %vm637 = vcmask 785920
        %638 = vst.msk [vmem:[%s353] sm:$0xff] %vm637, %v635
        %v639 = vsel %vm631, %v623, %v573
        %v640 = vsel %vm631, %v617, %v574
        %v641 = vld [vmem:[#allocation2 + $0x18] sm:$0xff]
        %643 = vrot.lane.b32.xlu0 %v639, 32
        %v644 = vpop.permute.xlu0 %643
        %v645 = vsel %vm440, %v644, 0
        %647 = vmatpush.msra.mxu0 0.0
        %648 = vmatpush.msra.mxu0 0.0
        %649 = vmatpush.msra.mxu0 0.0
        %650 = vmatpush.msra.mxu0 0.0
        %651 = vmatpush.msra.mxu0 0.0
        %652 = vmatpush.msra.mxu0 0.0
        %653 = vmatpush.msra.mxu0 0.0
        %654 = vmatpush.msra.mxu0 0.0
        %655 = vmatpush.msra.mxu0 0.0
        %656 = vmatpush.msra.mxu0 0.0
        %657 = vmatpush.msra.mxu0 0.0
        %658 = vmatpush.msra.mxu0 0.0
        %659 = vmatpush.msra.mxu0 %v436
        %660 = vmatpush.msra.mxu0 %v435
        %661 = vmatpush.msra.mxu0 %v434
        %662 = vmatpush.msra.mxu0 %v433
        %663 = vmatmul.f32.gmra.mxu0 %v645
        %v664 = vpop.f32.mrf.mxu0
        %v665 = vadd.f32 0.0, %v664
        %666 = vdwg.mxu0
        %v667 = vadd.f32 %v641, %v665
        %v668 = vmul.f32 %v667, 0.5
        %v669 = vtanh.pop %v668
        %v670 = vadd.f32 %v669, 1.0
        %v671 = vmul.f32 %v670, 0.5
        %v672 = vtanh.pop %v667
        %v673 = vmul.f32 %v671, %v640
        %675 = vrot.lane.b32.xlu0 %v672, 64
        %v676 = vpop.permute.xlu0 %675
        %v678 = vmul.f32 %v671, %v676
        %680 = vrot.lane.b32.xlu0 %v678, 32
        %v681 = vpop.permute.xlu0 %680
        %v683 = vadd.f32 %v673, %v681
        %v684 = vtanh.pop %v683
        %686 = vrot.lane.b32.xlu0 %v684, 64
        %v687 = vpop.permute.xlu0 %686
        %v689 = vmul.f32 %v671, %v687
        %s690 = sadd.s32 %s363, 3
        %v691 = vstv %s690
        %vm692 = vcmp.lt.s32.totalorder %v691, %v432
        %v693 = vsel %vm692, 1, 0
        %694 = vset.pattern.permute.xlu0 0
        %695 = vperm.xlu0 %694, %v693
        %v696 = vpop.permute.xlu0 %695
        %vm697 = vcmp.eq.s32.totalorder %v696, 1
        %v698 = vsel %vm697, %v689, 0.0
        %vm699 = vcmask 1048320
        %700 = vst.msk [vmem:[%s353] sm:$0xff] %vm699, %v698
        %v701 = vsel %vm697, %v689, %v639
        %v702 = vsel %vm697, %v683, %v640
        %704 = vrot.lane.b32.xlu0 %v701, 32
        %v705 = vpop.permute.xlu0 %704
        %707 = vst.msk [vmem:[#allocation3] sm:$0xff] %vm440, %v705
        %709 = vrot.lane.b32.xlu0 %v702, 96
        %v710 = vpop.permute.xlu0 %709
        %712 = vst.msk [vmem:[#allocation4] sm:$0xff] %vm440, %v710
      $region48: #{lstm_forward.1} parent=39 // pred_fallthru
        _
      %p713 = scmp.ge.s32.totalorder %s363, %s371
      // Predicated region
      $region49: #{lstm_forward.1} parent=39 // pred_check
        %p714 = pneg %p713
      $region50: #{lstm_forward.1} parent=39 // pred_check_branch
        %716 = sbr.rel (%p714) target = $region52
      $region51: #{lstm_forward.1} parent=39 // pred_region
        %717 = vst [vmem:[%s353] sm:$0xff] 0.0
      $region52: #{lstm_forward.1} parent=39 // pred_fallthru
        _
      %p718 = scmp.eq.s32.totalorder %s33, 2
      // Predicated region
      $region53: #{lstm_forward.1} parent=39 // pred_check
        %p719 = pneg %p718
      $region54: #{lstm_forward.1} parent=39 // pred_check_branch
        %721 = sbr.rel (%p719) target = $region56
      $region55: #{lstm_forward.1} parent=39 // pred_region
        %v722 = vld [vmem:[#allocation3] sm:$0xff]
        %vm723 = vcmask 261120
        %724 = vst.msk [vmem:[%s357] sm:$0xff] %vm723, %v722
        %v725 = vld [vmem:[#allocation4] sm:$0xff]
        %726 = vst.msk [vmem:[%s361] sm:$0xff] %vm723, %v725
      $region56: #{lstm_forward.1} parent=39 // pred_fallthru
        _
      %p727 = scmp.lt.s32.totalorder %s32, 1
      %s728 = scalar_select %p727, %s32, 1
      %p729 = scmp.lt.s32.totalorder %s33, 2
      %s730 = scalar_select %p729, %s33, 2
      %s731 = smul.addr %s728, 3
      %s732 = sadd.s32 %s730, %s731
      %s733 = smul.addr %s732, 8
      %s734 = scalar_lea.vmem %s6, %s733
      %p735 = scmp.lt.s32.totalorder %s32, 1
      %s736 = scalar_select %p735, %s32, 1
      %s737 = smul.addr %s736, 8
      %s738 = scalar_lea.vmem %s7, %s737
      %p739 = scmp.lt.s32.totalorder %s32, 1
      %s740 = scalar_select %p739, %s32, 1
      %s741 = smul.addr %s740, 8
      %s742 = scalar_lea.vmem %s8, %s741
      // Predicated region
      $region57: #{lstm_forward.1} parent=39 // pred_check
        %p743 = pneg %p177
      $region58: #{lstm_forward.1} parent=39 // pred_check_branch
        %745 = sbr.rel (%p743) target = $region60
      $region59: #{lstm_forward.1} parent=39 // pred_region
        _
      $region60: #{lstm_forward.1} parent=39 // pred_fallthru
        _
      // Predicated region
      $region61: #{lstm_forward.1} parent=39 // pred_check
        %p746 = pneg %p203
      $region62: #{lstm_forward.1} parent=39 // pred_check_branch
        %748 = sbr.rel (%p746) target = $region64
      $region63: #{lstm_forward.1} parent=39 // pred_region
        _
      $region64: #{lstm_forward.1} parent=39 // pred_fallthru
        _
      // Predicated region
      $region65: #{lstm_forward.1} parent=39 // pred_check
        %p749 = pneg %p229
      $region66: #{lstm_forward.1} parent=39 // pred_check_branch
        %751 = sbr.rel (%p749) target = $region68
      $region67: #{lstm_forward.1} parent=39 // pred_region
        _
      $region68: #{lstm_forward.1} parent=39 // pred_fallthru
        _
    $region40: #{lstm_forward.1} parent=5 // pred_fallthru
      _
    %p752 = scmp.le.s32.totalorder 2, %s23
    // Predicated region
    $region69: #{lstm_forward.1} parent=5 // pred_check
      %p753 = pneg %p752
    $region70: #{lstm_forward.1} parent=5 // pred_check_branch
      %755 = sbr.rel (%p753) target = $region72
    $region71: #{lstm_forward.1} parent=5 // pred_region
      %s756 = ssub.s32 %s23, 2
      // Predicated region
      $region73: #{lstm_forward.1} parent=71 // pred_check
        %p757 = pneg %p183
      $region74: #{lstm_forward.1} parent=71 // pred_check_branch
        %759 = sbr.rel (%p757) target = $region76
      $region75: #{lstm_forward.1} parent=71 // pred_region
        %p760 = scmp.lt.s32.totalorder %s34, 1
        %s761 = scalar_select %p760, %s34, 1
        %p762 = scmp.lt.s32.totalorder %s35, 2
        %s763 = scalar_select %p762, %s35, 2
        %s764 = smul.addr %s761, 3
        %s765 = sadd.s32 %s763, %s764
        %s766 = smul.addr %s765, 8
        %s767 = scalar_lea.vmem %s6, %s766
      $region76: #{lstm_forward.1} parent=71 // pred_fallthru
        _
      // Predicated region
      $region77: #{lstm_forward.1} parent=71 // pred_check
        %p768 = pneg %p209
      $region78: #{lstm_forward.1} parent=71 // pred_check_branch
        %770 = sbr.rel (%p768) target = $region80
      $region79: #{lstm_forward.1} parent=71 // pred_region
        %p771 = scmp.lt.s32.totalorder %s34, 1
        %s772 = scalar_select %p771, %s34, 1
        %s773 = smul.addr %s772, 8
        %s774 = scalar_lea.vmem %s7, %s773
      $region80: #{lstm_forward.1} parent=71 // pred_fallthru
        _
      // Predicated region
      $region81: #{lstm_forward.1} parent=71 // pred_check
        %p775 = pneg %p235
      $region82: #{lstm_forward.1} parent=71 // pred_check_branch
        %777 = sbr.rel (%p775) target = $region84
      $region83: #{lstm_forward.1} parent=71 // pred_region
        %p778 = scmp.lt.s32.totalorder %s34, 1
        %s779 = scalar_select %p778, %s34, 1
        %s780 = smul.addr %s779, 8
        %s781 = scalar_lea.vmem %s8, %s780
      $region84: #{lstm_forward.1} parent=71 // pred_fallthru
        _
    $region72: #{lstm_forward.1} parent=5 // pred_fallthru
      _
  $region6: #{lstm_forward.1} parent=0 // loop_footer
    %s27 = sadd.s32 1, %s23
  $region7: #{lstm_forward.1} parent=0 // loop_footer_branch
    %22 = sbr.rel target = $region3
  $region8: #{lstm_forward.1} parent=0 // loop_exit
    _

</llo_original>
